<compile_context>
chip_gen: v5e
topology: v5e:2x2
jax: 0.10.0
libtpu: 0.0.40
codegen_flags: <defaults>
</compile_context>

<pallas_src>
import jax
import jax.numpy as jnp
from jax.experimental import pallas as pl
from jax.experimental.pallas import tpu as pltpu

LANE = 128  # pad hidden / head feature dims to a full lane width


def _round_up(x, m):
    return ((x + m - 1) // m) * m


def _ffnet_kernel(x_ref, w1_ref, w2_ref, wh_ref, bias_ref, out_ref):
    """Fused forward: out = ((x@W1 + b1) @ W2 + b2) @ Whead + bhead.

    Whead = [h2o.T | h2v.T | zero-pad] so both heads come out of a single
    lane-dense 128-wide output slab. All matmuls accumulate in f32; the
    bias-add epilogue is f32 regardless of the weight compute dtype.
    """
    cdt = w1_ref.dtype
    h1p = w1_ref.shape[1]
    h2p = w2_ref.shape[1]
    hwp = wh_ref.shape[1]

    # Static slices of the consolidated bias array: zero-cost Ref views.
    b1 = bias_ref[0:1, :h1p]   # [1, H1_pad] f32
    b2 = bias_ref[1:2, :h2p]   # [1, H2_pad] f32
    bh = bias_ref[2:3, :hwp]   # [1, 128]    f32

    x = x_ref[...].astype(cdt)
    h1 = jnp.dot(x, w1_ref[...], preferred_element_type=jnp.float32) + b1
    act = jnp.dot(h1.astype(cdt), w2_ref[...],
                  preferred_element_type=jnp.float32) + b2
    head = jnp.dot(act.astype(cdt), wh_ref[...],
                   preferred_element_type=jnp.float32) + bh
    out_ref[...] = head.astype(out_ref.dtype)


def pack_params(raw, compute_dtype=jnp.float32):
    """Pad + fuse the four nn.Linear layers into lane-dense kernel operands.

    raw holds pre-transposed [in, out] weights and [1, out] biases.
    Returns:
      w1   : [input_size, H1_pad]   (zero-padded columns)
      w2   : [H1_pad,  H2_pad]      (zero-padded rows & columns)
      wh   : [H2_pad,  128]         ([h2o | h2v | zeros])
      bias : [3, max(H1_pad,H2_pad,128)] f32
             row0=b1, row1=b2, row2=[bo | bv | 0]
    """
    in_size, h1 = raw["w1"].shape
    _, h2 = raw["w2"].shape
    _, a = raw["wo"].shape
    h1p = _round_up(h1, LANE)
    h2p = _round_up(h2, LANE)
    head_w = LANE
    assert a + 1 <= head_w, "num_actions + 1 must fit in one 128-lane slab"

    w1 = jnp.zeros((in_size, h1p), jnp.float32).at[:, :h1].set(raw["w1"])
    w2 = jnp.zeros((h1p, h2p), jnp.float32).at[:h1, :h2].set(raw["w2"])
    wh = (jnp.zeros((h2p, head_w), jnp.float32)
          .at[:h2, :a].set(raw["wo"])
          .at[:h2, a:a + 1].set(raw["wv"]))

    bias_w = max(h1p, h2p, head_w)
    bias = (jnp.zeros((3, bias_w), jnp.float32)
            .at[0, :h1].set(raw["b1"][0])
            .at[1, :h2].set(raw["b2"][0])
            .at[2, :a].set(raw["bo"][0])
            .at[2, a:a + 1].set(raw["bv"][0]))

    return {
        "w1": w1.astype(compute_dtype),
        "w2": w2.astype(compute_dtype),
        "wh": wh.astype(compute_dtype),
        "bias": bias,                  # biases stay f32 (epilogue in f32)
        "num_actions": a,
    }


def standard_ffnetwork_forward(inputs, hidden, packed, *, block_b=512):
    """Fused forward pass. `packed` comes from pack_params().

    Returns (activout [B, num_actions], valueout [B, 1], hidden) — matching the
    PyTorch module's forward().
    """
    B, in_size = inputs.shape
    a = packed["num_actions"]
    head_w = packed["wh"].shape[1]
    h1p = packed["w1"].shape[1]
    h2p = packed["w2"].shape[1]

    # Batch tiling: blocks of up to `block_b` rows (multiple of 8); pad B up
    # only when needed (padded rows are inert and sliced away afterwards).
    tb = min(block_b, _round_up(B, 8))
    b_pad = _round_up(B, tb)
    x = inputs
    if b_pad != B:
        x = jnp.pad(x, ((0, b_pad - B), (0, 0)))

    n_blocks = b_pad // tb
    flops = 2 * b_pad * (in_size * h1p + h1p * h2p + h2p * head_w)
    bytes_accessed = (
        x.size * x.dtype.itemsize
        + packed["w1"].size * packed["w1"].dtype.itemsize
        + packed["w2"].size * packed["w2"].dtype.itemsize
        + packed["wh"].size * packed["wh"].dtype.itemsize
        + packed["bias"].size * packed["bias"].dtype.itemsize
        + b_pad * head_w * 4
    )

    head = pl.pallas_call(
        _ffnet_kernel,
        out_shape=jax.ShapeDtypeStruct((b_pad, head_w), jnp.float32),
        grid_spec=pltpu.PrefetchScalarGridSpec(
            num_scalar_prefetch=0,
            grid=(n_blocks,),
            in_specs=[
                pl.BlockSpec((tb, in_size), lambda i: (i, 0)),
                # Constant index_map => weights stay VMEM-resident across steps.
                pl.BlockSpec(packed["w1"].shape, lambda i: (0, 0)),
                pl.BlockSpec(packed["w2"].shape, lambda i: (0, 0)),
                pl.BlockSpec(packed["wh"].shape, lambda i: (0, 0)),
                pl.BlockSpec(packed["bias"].shape, lambda i: (0, 0)),
            ],
            out_specs=pl.BlockSpec((tb, head_w), lambda i: (i, 0)),
        ),
        compiler_params=pltpu.CompilerParams(
            dimension_semantics=("parallel",)),
        cost_estimate=pl.CostEstimate(flops=flops, transcendentals=0,
                                      bytes_accessed=bytes_accessed),
    )(x, packed["w1"], packed["w2"], packed["wh"], packed["bias"])

    activout = head[:B, :a]          # policy logits  [B, num_actions]
    valueout = head[:B, a:a + 1]     # value          [B, 1]
    # hidden is untouched by this network (pure pass-through, as in PyTorch).
    return activout, valueout, hidden


def init_params(key, input_size, first_hidden, second_hidden, num_actions):
    """Deterministic init mimicking torch.nn.Linear (uniform +/- 1/sqrt(fan_in)).
    Weights stored pre-transposed as [in, out], biases as [1, out]."""
    ks = jax.random.split(key, 8)

    def linear(kw, kb, fan_in, fan_out):
        bound = 1.0 / jnp.sqrt(jnp.float32(fan_in))
        w = jax.random.uniform(kw, (fan_in, fan_out), jnp.float32, -bound, bound)
        b = jax.random.uniform(kb, (1, fan_out), jnp.float32, -bound, bound)
        return w, b

    w1, b1 = linear(ks[0], ks[1], input_size, first_hidden)
    w2, b2 = linear(ks[2], ks[3], first_hidden, second_hidden)
    wo, bo = linear(ks[4], ks[5], second_hidden, num_actions)
    wv, bv = linear(ks[6], ks[7], second_hidden, 1)
    return {"w1": w1, "b1": b1, "w2": w2, "b2": b2,
            "wo": wo, "bo": bo, "wv": wv, "bv": bv}


if __name__ == "__main__":
    # Small shapes consistent with the module's forward.
    B = 8
    INPUT_SIZE = 32
    FIRST_HIDDEN = 64
    SECOND_HIDDEN = 64
    NUM_ACTIONS = 4

    key = jax.random.PRNGKey(0)
    k_x, k_p = jax.random.split(key)

    raw = init_params(k_p, INPUT_SIZE, FIRST_HIDDEN, SECOND_HIDDEN, NUM_ACTIONS)
    packed = pack_params(raw, compute_dtype=jnp.float32)  # bf16 also supported

    x = jax.random.normal(k_x, (B, INPUT_SIZE), dtype=jnp.float32)
    hidden = jnp.zeros((B, FIRST_HIDDEN), dtype=jnp.float32)

    act_out, val_out, hidden_out = standard_ffnetwork_forward(x, hidden, packed)
    jax.block_until_ready((act_out, val_out, hidden_out))

    # Reference check in plain JAX against the unfused, unpadded weights.
    h1_ref = x @ raw["w1"] + raw["b1"]
    act_ref = h1_ref @ raw["w2"] + raw["b2"]
    ao_ref = act_ref @ raw["wo"] + raw["bo"]
    vo_ref = act_ref @ raw["wv"] + raw["bv"]
    assert jnp.allclose(act_out, ao_ref, atol=1e-4, rtol=1e-4)
    assert jnp.allclose(val_out, vo_ref, atol=1e-4, rtol=1e-4)
    assert act_out.shape == (B, NUM_ACTIONS)
    assert val_out.shape == (B, 1)
    assert hidden_out.shape == hidden.shape

    print("KERNEL_OK")
</pallas_src>

<mosaic_0001>
module attributes {stable_mosaic.version = 11 : i64} {
  func.func @_ffnet_kernel(%arg0: i32, %arg1: memref<8x32xf32, #tpu.memory_space<vmem>>, %arg2: memref<32x128xf32, #tpu.memory_space<vmem>>, %arg3: memref<128x128xf32, #tpu.memory_space<vmem>>, %arg4: memref<128x128xf32, #tpu.memory_space<vmem>>, %arg5: memref<3x128xf32, #tpu.memory_space<vmem>>, %arg6: memref<8x128xf32, #tpu.memory_space<vmem>>) attributes {dimension_semantics = [#tpu.dimension_semantics<parallel>], iteration_bounds = array<i64: 1>, scalar_prefetch = 0 : i64, scratch_operands = 0 : i64, tpu.core_type = #tpu.core_type<tc>, window_params = [{transform_indices = @transform_0, window_bounds = array<i64: 8, 32>}, {pipeline_mode = #tpu.pipeline_mode<synchronous>, transform_indices = @transform_1, window_bounds = array<i64: 32, 128>}, {pipeline_mode = #tpu.pipeline_mode<synchronous>, transform_indices = @transform_2, window_bounds = array<i64: 128, 128>}, {pipeline_mode = #tpu.pipeline_mode<synchronous>, transform_indices = @transform_3, window_bounds = array<i64: 128, 128>}, {pipeline_mode = #tpu.pipeline_mode<synchronous>, transform_indices = @transform_4, window_bounds = array<i64: 3, 128>}, {transform_indices = @transform_5, window_bounds = array<i64: 8, 128>}]} {
    %c0 = arith.constant 0 : index
    %c0_0 = arith.constant 0 : index
    %0 = vector.load %arg5[%c0, %c0_0] : memref<3x128xf32, #tpu.memory_space<vmem>>, vector<1x128xf32>
    %c1 = arith.constant 1 : index
    %c0_1 = arith.constant 0 : index
    %1 = vector.load %arg5[%c1, %c0_1] : memref<3x128xf32, #tpu.memory_space<vmem>>, vector<1x128xf32>
    %c2 = arith.constant 2 : index
    %c0_2 = arith.constant 0 : index
    %2 = vector.load %arg5[%c2, %c0_2] : memref<3x128xf32, #tpu.memory_space<vmem>>, vector<1x128xf32>
    %c0_3 = arith.constant 0 : index
    %c0_4 = arith.constant 0 : index
    %3 = vector.load %arg1[%c0_3, %c0_4] : memref<8x32xf32, #tpu.memory_space<vmem>>, vector<8x32xf32>
    %c0_5 = arith.constant 0 : index
    %c0_6 = arith.constant 0 : index
    %4 = vector.load %arg2[%c0_5, %c0_6] : memref<32x128xf32, #tpu.memory_space<vmem>>, vector<32x128xf32>
    %cst = arith.constant dense<0.000000e+00> : vector<8x128xf32>
    %5 = tpu.matmul %3, %4, %cst {dimension_numbers = #tpu.dot_dimension_numbers<[1], [0], [0], [1], [0, 0, 1, 1], [], []>} : vector<8x32xf32>, vector<32x128xf32>, vector<8x128xf32> -> vector<8x128xf32>
    %6 = vector.broadcast %0 : vector<1x128xf32> to vector<8x128xf32>
    %7 = arith.addf %5, %6 : vector<8x128xf32>
    %c0_7 = arith.constant 0 : index
    %c0_8 = arith.constant 0 : index
    %8 = vector.load %arg3[%c0_7, %c0_8] : memref<128x128xf32, #tpu.memory_space<vmem>>, vector<128x128xf32>
    %cst_9 = arith.constant dense<0.000000e+00> : vector<8x128xf32>
    %9 = tpu.matmul %7, %8, %cst_9 {dimension_numbers = #tpu.dot_dimension_numbers<[1], [0], [0], [1], [0, 0, 1, 1], [], []>} : vector<8x128xf32>, vector<128x128xf32>, vector<8x128xf32> -> vector<8x128xf32>
    %10 = vector.broadcast %1 : vector<1x128xf32> to vector<8x128xf32>
    %11 = arith.addf %9, %10 : vector<8x128xf32>
    %c0_10 = arith.constant 0 : index
    %c0_11 = arith.constant 0 : index
    %12 = vector.load %arg4[%c0_10, %c0_11] : memref<128x128xf32, #tpu.memory_space<vmem>>, vector<128x128xf32>
    %cst_12 = arith.constant dense<0.000000e+00> : vector<8x128xf32>
    %13 = tpu.matmul %11, %12, %cst_12 {dimension_numbers = #tpu.dot_dimension_numbers<[1], [0], [0], [1], [0, 0, 1, 1], [], []>} : vector<8x128xf32>, vector<128x128xf32>, vector<8x128xf32> -> vector<8x128xf32>
    %14 = vector.broadcast %2 : vector<1x128xf32> to vector<8x128xf32>
    %15 = arith.addf %13, %14 : vector<8x128xf32>
    %c0_13 = arith.constant 0 : index
    %c0_14 = arith.constant 0 : index
    %16 = vector.load %arg6[%c0_13, %c0_14] : memref<8x128xf32, #tpu.memory_space<vmem>>, vector<8x128xf32>
    tpu.vector_store %arg6[%c0_13, %c0_14], %15 {strides = array<i32>} : memref<8x128xf32, #tpu.memory_space<vmem>>, vector<8x128xf32>,
    return
  }
  func.func @transform_0(%arg0: i32) -> (i32, i32) {
    %c0_i32 = arith.constant 0 : i32
    %c0_i32_0 = arith.constant 0 : i32
    return %arg0, %c0_i32 : i32, i32
  }
  func.func @transform_1(%arg0: i32) -> (i32, i32) {
    %c0_i32 = arith.constant 0 : i32
    %c0_i32_0 = arith.constant 0 : i32
    %c0_i32_1 = arith.constant 0 : i32
    return %c0_i32, %c0_i32_0 : i32, i32
  }
  func.func @transform_2(%arg0: i32) -> (i32, i32) {
    %c0_i32 = arith.constant 0 : i32
    %c0_i32_0 = arith.constant 0 : i32
    %c0_i32_1 = arith.constant 0 : i32
    return %c0_i32, %c0_i32_0 : i32, i32
  }
  func.func @transform_3(%arg0: i32) -> (i32, i32) {
    %c0_i32 = arith.constant 0 : i32
    %c0_i32_0 = arith.constant 0 : i32
    %c0_i32_1 = arith.constant 0 : i32
    return %c0_i32, %c0_i32_0 : i32, i32
  }
  func.func @transform_4(%arg0: i32) -> (i32, i32) {
    %c0_i32 = arith.constant 0 : i32
    %c0_i32_0 = arith.constant 0 : i32
    %c0_i32_1 = arith.constant 0 : i32
    return %c0_i32, %c0_i32_0 : i32, i32
  }
  func.func @transform_5(%arg0: i32) -> (i32, i32) {
    %c0_i32 = arith.constant 0 : i32
    %c0_i32_0 = arith.constant 0 : i32
    return %arg0, %c0_i32 : i32, i32
  }
}

</mosaic_0001>

<llo_original>
// kernel: tpu_custom_call.1
$region0: #{tpu_custom_call.1}
  #allocation0 [shape = 'u32[]', space=smem, size = 0x4, offset = 0x4, fixed_abs, tag = 'smem constant byte address 0x4 - core index']
  #allocation1 [shape = 'u32[72,128]{1,0:T(1,128)}', space=vmem, size = 0x9000, scoped, tag = 'internal scratch']
  %s0 = inlined_call_operand.hbm [shape: f32[8,32], index: 0, kind: input, shape index: {}]
  %s1 = inlined_call_operand.hbm [shape: f32[32,128], index: 1, kind: input, shape index: {}]
  %s2 = inlined_call_operand.hbm [shape: f32[128,128], index: 2, kind: input, shape index: {}]
  %s3 = inlined_call_operand.hbm [shape: f32[128,128], index: 3, kind: input, shape index: {}]
  %s4 = inlined_call_operand.hbm [shape: f32[3,128], index: 4, kind: input, shape index: {}]
  %s5 = inlined_call_operand.hbm [shape: f32[8,128], index: 5, kind: output, shape index: {}]
  %s6 = sld [smem:[#allocation0]]
  $region50: #{tpu_custom_call.1} parent=0
    _
  %s8 = ssub.s32 1, %s6
  %s9 = scalar_select 0, %s8, %s6
  $region1: #{tpu_custom_call.1} parent=0
    #allocation2 [shape = 'u8[4096]{0}', space=vmem, size = 0x1000, scoped, tag = 'input window, operand 0, single buffered']
    #allocation3 [shape = 's32[1]{0}', space=sflag, size = 0x4, scoped, tag = 'scoped memory for tpu_custom_call.1']
    #allocation4 [shape = 's32[1]{0}', space=sflag, size = 0x4, scoped, tag = 'scoped memory for tpu_custom_call.1']
    #allocation5 [shape = 'u8[16384]{0}', space=vmem, size = 0x4000, scoped, tag = 'input window, operand 1, single buffered']
    #allocation6 [shape = 's32[1]{0}', space=sflag, size = 0x4, scoped, tag = 'scoped memory for tpu_custom_call.1']
    #allocation7 [shape = 'u8[65536]{0}', space=vmem, size = 0x10000, scoped, tag = 'input window, operand 2, single buffered']
    #allocation8 [shape = 'u8[65536]{0}', space=vmem, size = 0x10000, scoped, tag = 'input window, operand 3, single buffered']
    #allocation9 [shape = 's32[1]{0}', space=sflag, size = 0x4, scoped, tag = 'scoped memory for tpu_custom_call.1']
    #allocation10 [shape = 'u8[2048]{0}', space=vmem, size = 0x800, scoped, tag = 'input window, operand 4, single buffered']
    #allocation11 [shape = 'u8[4096]{0}', space=vmem, size = 0x1000, scoped, tag = 'output window, operand 0, single buffered']
    %10 = vsyncpa [#allocation3], 0
    %11 = vsyncpa [#allocation6], 0
    %12 = vsyncpa [#allocation9], 0
    %13 = vsyncpa [#allocation4], 0
    // Predicated region
    $region2: #{tpu_custom_call.1} parent=1 // pred_check
      _
    $region3: #{tpu_custom_call.1} parent=1 // pred_check_branch
      %15 = sbr.rel (0) target = $region5
    $region4: #{tpu_custom_call.1} parent=1 // pred_region
      %17 = vsyncadd [#allocation3], 0
      %s19 = sshll.u32 %s0, 4
      %s20 = int_to_ptr.hbm [resolvable:$true] %s19
      %s21 = sshll.u32 [#allocation2], 4
      %s22 = int_to_ptr.vmem [resolvable:$true] %s21
      %24 = dma.hbm_to_vmem [thread:$0]  %s20, 128, %s22, [#allocation3]
    $region5: #{tpu_custom_call.1} parent=1 // pred_fallthru
      _
    // Predicated region
    $region6: #{tpu_custom_call.1} parent=1 // pred_check
      _
    $region7: #{tpu_custom_call.1} parent=1 // pred_check_branch
      %26 = sbr.rel (0) target = $region9
    $region8: #{tpu_custom_call.1} parent=1 // pred_region
      %28 = vsyncadd [#allocation6], 0
      %s29 = sshll.u32 %s1, 4
      %s30 = int_to_ptr.hbm [resolvable:$true] %s29
      %s31 = sshll.u32 [#allocation5], 4
      %s32 = int_to_ptr.vmem [resolvable:$true] %s31
      %37 = dma.hbm_to_vmem [thread:$0]  %s30, 512, %s32, [#allocation6], 128, 128, 8
    $region9: #{tpu_custom_call.1} parent=1 // pred_fallthru
      _
    // Predicated region
    $region10: #{tpu_custom_call.1} parent=1 // pred_check
      _
    $region11: #{tpu_custom_call.1} parent=1 // pred_check_branch
      %39 = sbr.rel (0) target = $region13
    $region12: #{tpu_custom_call.1} parent=1 // pred_region
      %41 = vsyncadd [#allocation6], 0
      %s42 = sshll.u32 %s2, 4
      %s43 = int_to_ptr.hbm [resolvable:$true] %s42
      %s44 = sshll.u32 [#allocation7], 4
      %s45 = int_to_ptr.vmem [resolvable:$true] %s44
      %50 = dma.hbm_to_vmem [thread:$0]  %s43, 2048, %s45, [#allocation6], 128, 128, 8
    $region13: #{tpu_custom_call.1} parent=1 // pred_fallthru
      _
    // Predicated region
    $region14: #{tpu_custom_call.1} parent=1 // pred_check
      _
    $region15: #{tpu_custom_call.1} parent=1 // pred_check_branch
      %52 = sbr.rel (0) target = $region17
    $region16: #{tpu_custom_call.1} parent=1 // pred_region
      %54 = vsyncadd [#allocation9], 0
      %s55 = sshll.u32 %s3, 4
      %s56 = int_to_ptr.hbm [resolvable:$true] %s55
      %s57 = sshll.u32 [#allocation8], 4
      %s58 = int_to_ptr.vmem [resolvable:$true] %s57
      %63 = dma.hbm_to_vmem [thread:$0]  %s56, 2048, %s58, [#allocation9], 128, 128, 8
    $region17: #{tpu_custom_call.1} parent=1 // pred_fallthru
      _
    // Predicated region
    $region18: #{tpu_custom_call.1} parent=1 // pred_check
      _
    $region19: #{tpu_custom_call.1} parent=1 // pred_check_branch
      %65 = sbr.rel (0) target = $region21
    $region20: #{tpu_custom_call.1} parent=1 // pred_region
      %67 = vsyncadd [#allocation9], 0
      %s69 = sshll.u32 %s4, 4
      %s70 = int_to_ptr.hbm [resolvable:$true] %s69
      %s71 = sshll.u32 [#allocation10], 4
      %s72 = int_to_ptr.vmem [resolvable:$true] %s71
      %74 = dma.hbm_to_vmem [thread:$0]  %s70, 64, %s72, [#allocation9]
    $region21: #{tpu_custom_call.1} parent=1 // pred_fallthru
      _
    // Predicated region
    $region22: #{tpu_custom_call.1} parent=1 // pred_check
      _
    $region23: #{tpu_custom_call.1} parent=1 // pred_check_branch
      %76 = sbr.rel (0) target = $region25
    $region24: #{tpu_custom_call.1} parent=1 // pred_region
      %78 = dma.done [#allocation3], 128
    $region25: #{tpu_custom_call.1} parent=1 // pred_fallthru
      _
    // Predicated region
    $region26: #{tpu_custom_call.1} parent=1 // pred_check
      _
    $region27: #{tpu_custom_call.1} parent=1 // pred_check_branch
      %80 = sbr.rel (0) target = $region29
    $region28: #{tpu_custom_call.1} parent=1 // pred_region
      %82 = dma.done [#allocation6], 512
    $region29: #{tpu_custom_call.1} parent=1 // pred_fallthru
      _
    // Predicated region
    $region30: #{tpu_custom_call.1} parent=1 // pred_check
      _
    $region31: #{tpu_custom_call.1} parent=1 // pred_check_branch
      %84 = sbr.rel (0) target = $region33
    $region32: #{tpu_custom_call.1} parent=1 // pred_region
      %86 = dma.done [#allocation6], 2048
    $region33: #{tpu_custom_call.1} parent=1 // pred_fallthru
      _
    // Predicated region
    $region34: #{tpu_custom_call.1} parent=1 // pred_check
      _
    $region35: #{tpu_custom_call.1} parent=1 // pred_check_branch
      %88 = sbr.rel (0) target = $region37
    $region36: #{tpu_custom_call.1} parent=1 // pred_region
      %90 = dma.done [#allocation9], 2048
    $region37: #{tpu_custom_call.1} parent=1 // pred_fallthru
      _
    // Predicated region
    $region38: #{tpu_custom_call.1} parent=1 // pred_check
      _
    $region39: #{tpu_custom_call.1} parent=1 // pred_check_branch
      %92 = sbr.rel (0) target = $region41
    $region40: #{tpu_custom_call.1} parent=1 // pred_region
      %94 = dma.done [#allocation9], 64
    $region41: #{tpu_custom_call.1} parent=1 // pred_fallthru
      _
    %v95 = vld [vmem:[#allocation10] sm:$0x1]
    %v96 = vld [vmem:[#allocation10 + $0x1] sm:$0x1]
    %v97 = vld [vmem:[#allocation10 + $0x2] sm:$0x1]
    %v98 = vld [vmem:[#allocation2] sm:$0xff]
    %v99 = vld [vmem:[#allocation5] sm:$0xff]
    %v100 = vld [vmem:[#allocation5 + $0x8] sm:$0xff]
    %v101 = vld [vmem:[#allocation5 + $0x10] sm:$0xff]
    %v102 = vld [vmem:[#allocation5 + $0x18] sm:$0xff]
    %v103 = vperm.slane %v95, 0
    %vm104 = vcmask 261120
    %v106 = vsel %vm104, %v98, 0
    %108 = vmatpush.msra.mxu0 0.0
    %109 = vmatpush.msra.mxu0 0.0
    %110 = vmatpush.msra.mxu0 0.0
    %111 = vmatpush.msra.mxu0 0.0
    %112 = vmatpush.msra.mxu0 0.0
    %113 = vmatpush.msra.mxu0 0.0
    %114 = vmatpush.msra.mxu0 0.0
    %115 = vmatpush.msra.mxu0 0.0
    %116 = vmatpush.msra.mxu0 0.0
    %117 = vmatpush.msra.mxu0 0.0
    %118 = vmatpush.msra.mxu0 0.0
    %119 = vmatpush.msra.mxu0 0.0
    %120 = vmatpush.msra.mxu0 %v102
    %121 = vmatpush.msra.mxu0 %v101
    %122 = vmatpush.msra.mxu0 %v100
    %123 = vmatpush.msra.mxu0 %v99
    %124 = vmatmul.f32.gmra.mxu0 %v106
    %v125 = vpop.f32.mrf.mxu0
    %v126 = vadd.f32 %v103, %v125
    %127 = vdwg.mxu0
    %v128 = vld [vmem:[#allocation7] sm:$0xff]
    %v129 = vld [vmem:[#allocation7 + $0x8] sm:$0xff]
    %v130 = vld [vmem:[#allocation7 + $0x10] sm:$0xff]
    %v131 = vld [vmem:[#allocation7 + $0x18] sm:$0xff]
    %v132 = vld [vmem:[#allocation7 + $0x20] sm:$0xff]
    %v133 = vld [vmem:[#allocation7 + $0x28] sm:$0xff]
    %v134 = vld [vmem:[#allocation7 + $0x30] sm:$0xff]
    %v135 = vld [vmem:[#allocation7 + $0x38] sm:$0xff]
    %v136 = vld [vmem:[#allocation7 + $0x40] sm:$0xff]
    %v137 = vld [vmem:[#allocation7 + $0x48] sm:$0xff]
    %v138 = vld [vmem:[#allocation7 + $0x50] sm:$0xff]
    %v139 = vld [vmem:[#allocation7 + $0x58] sm:$0xff]
    %v140 = vld [vmem:[#allocation7 + $0x60] sm:$0xff]
    %v141 = vld [vmem:[#allocation7 + $0x68] sm:$0xff]
    %v142 = vld [vmem:[#allocation7 + $0x70] sm:$0xff]
    %v143 = vld [vmem:[#allocation7 + $0x78] sm:$0xff]
    %v144 = vperm.slane %v96, 0
    %145 = vmatpush.msra.mxu0 %v143
    %146 = vmatpush.msra.mxu0 %v142
    %147 = vmatpush.msra.mxu0 %v141
    %148 = vmatpush.msra.mxu0 %v140
    %149 = vmatpush.msra.mxu0 %v139
    %150 = vmatpush.msra.mxu0 %v138
    %151 = vmatpush.msra.mxu0 %v137
    %152 = vmatpush.msra.mxu0 %v136
    %153 = vmatpush.msra.mxu0 %v135
    %154 = vmatpush.msra.mxu0 %v134
    %155 = vmatpush.msra.mxu0 %v133
    %156 = vmatpush.msra.mxu0 %v132
    %157 = vmatpush.msra.mxu0 %v131
    %158 = vmatpush.msra.mxu0 %v130
    %159 = vmatpush.msra.mxu0 %v129
    %160 = vmatpush.msra.mxu0 %v128
    %161 = vmatmul.f32.gmra.mxu0 %v126
    %v162 = vpop.f32.mrf.mxu0
    %v163 = vadd.f32 %v144, %v162
    %164 = vdwg.mxu0
    %v165 = vld [vmem:[#allocation8] sm:$0xff]
    %v166 = vld [vmem:[#allocation8 + $0x8] sm:$0xff]
    %v167 = vld [vmem:[#allocation8 + $0x10] sm:$0xff]
    %v168 = vld [vmem:[#allocation8 + $0x18] sm:$0xff]
    %v169 = vld [vmem:[#allocation8 + $0x20] sm:$0xff]
    %v170 = vld [vmem:[#allocation8 + $0x28] sm:$0xff]
    %v171 = vld [vmem:[#allocation8 + $0x30] sm:$0xff]
    %v172 = vld [vmem:[#allocation8 + $0x38] sm:$0xff]
    %v173 = vld [vmem:[#allocation8 + $0x40] sm:$0xff]
    %v174 = vld [vmem:[#allocation8 + $0x48] sm:$0xff]
    %v175 = vld [vmem:[#allocation8 + $0x50] sm:$0xff]
    %v176 = vld [vmem:[#allocation8 + $0x58] sm:$0xff]
    %v177 = vld [vmem:[#allocation8 + $0x60] sm:$0xff]
    %v178 = vld [vmem:[#allocation8 + $0x68] sm:$0xff]
    %v179 = vld [vmem:[#allocation8 + $0x70] sm:$0xff]
    %v180 = vld [vmem:[#allocation8 + $0x78] sm:$0xff]
    %v181 = vperm.slane %v97, 0
    %182 = vmatpush.msra.mxu0 %v180
    %183 = vmatpush.msra.mxu0 %v179
    %184 = vmatpush.msra.mxu0 %v178
    %185 = vmatpush.msra.mxu0 %v177
    %186 = vmatpush.msra.mxu0 %v176
    %187 = vmatpush.msra.mxu0 %v175
    %188 = vmatpush.msra.mxu0 %v174
    %189 = vmatpush.msra.mxu0 %v173
    %190 = vmatpush.msra.mxu0 %v172
    %191 = vmatpush.msra.mxu0 %v171
    %192 = vmatpush.msra.mxu0 %v170
    %193 = vmatpush.msra.mxu0 %v169
    %194 = vmatpush.msra.mxu0 %v168
    %195 = vmatpush.msra.mxu0 %v167
    %196 = vmatpush.msra.mxu0 %v166
    %197 = vmatpush.msra.mxu0 %v165
    %198 = vmatmul.f32.gmra.mxu0 %v163
    %v199 = vpop.f32.mrf.mxu0
    %v200 = vadd.f32 %v181, %v199
    %201 = vdwg.mxu0
    %202 = vst [vmem:[#allocation11] sm:$0xff] %v200
    // Predicated region
    $region42: #{tpu_custom_call.1} parent=1 // pred_check
      _
    $region43: #{tpu_custom_call.1} parent=1 // pred_check_branch
      %204 = sbr.rel (0) target = $region45
    $region44: #{tpu_custom_call.1} parent=1 // pred_region
      %206 = vsyncadd [#allocation4], 0
      %s208 = sshll.u32 [#allocation11], 4
      %s209 = int_to_ptr.vmem [resolvable:$true] %s208
      %s210 = sshll.u32 %s5, 4
      %s211 = int_to_ptr.hbm [resolvable:$true] %s210
      %213 = dma.vmem_to_hbm [thread:$0]  %s209, 128, %s211, [#allocation4]
    $region45: #{tpu_custom_call.1} parent=1 // pred_fallthru
      _
    // Predicated region
    $region46: #{tpu_custom_call.1} parent=1 // pred_check
      _
    $region47: #{tpu_custom_call.1} parent=1 // pred_check_branch
      %215 = sbr.rel (0) target = $region49
    $region48: #{tpu_custom_call.1} parent=1 // pred_region
      %217 = dma.done [#allocation4], 128
    $region49: #{tpu_custom_call.1} parent=1 // pred_fallthru
      _
    %218 = vsyncpa [#allocation3], 1
    %219 = vsyncpa [#allocation6], 1
    %220 = vsyncpa [#allocation9], 1
    %221 = vsyncpa [#allocation4], 1

</llo_original>
